<compile_context>
chip_gen: v6e
topology: v6e:2x2x1
jax: 0.10.0
libtpu: 0.0.40
codegen_flags: <defaults>
</compile_context>

<pallas_src>
import numpy as np
import jax
import jax.numpy as jnp
from jax.experimental import pallas as pl
from jax.experimental.pallas import tpu as pltpu


# ----------------------------- Pallas kernel -------------------------------

def vn_autoencoder_kernel(we_ref, wd_ref, x_ref, z_ref, xo_ref):
    # we_ref: [latent, C_in]   wd_ref: [C_in, latent]   (compute dtype, e.g. bf16)
    # x_ref:  [C_in, tn]       z_ref: [latent, tn] f32  xo_ref: [C_in, tn] f32
    x = x_ref[...]
    z = jnp.dot(we_ref[...], x, preferred_element_type=jnp.float32)       # encoder
    xo = jnp.dot(wd_ref[...], z.astype(wd_ref.dtype),
                 preferred_element_type=jnp.float32)                      # decoder
    z_ref[...] = z.astype(z_ref.dtype)
    xo_ref[...] = xo.astype(xo_ref.dtype)


def vn_autoencoder_pallas(x_bc3n, weights, latent_channels, *,
                          compute_dtype=jnp.bfloat16, tn_cap=2048):
    """VNAutoEncoder forward (use_relu=False).

    x_bc3n:  [B, C_in, 3, N] float32
    weights: 6 PyTorch-layout (C_out, C_in) matrices:
             enc.l1, enc.l2, enc.l3, dec.l1, dec.l2, dec.l3
    returns: (x_out [B, C_in, 3, N] f32, z [B, latent, 3, N] f32)
    """
    B, C_in, three, N = x_bc3n.shape
    assert three == 3
    M3 = 3 * N

    # Collapse the linear chains offline (valid only because use_relu=False).
    w1, w2, w3, w4, w5, w6 = [jnp.asarray(w, jnp.float32) for w in weights]
    We = (w3 @ (w2 @ w1)).astype(compute_dtype)      # (latent, C_in)
    Wd = (w6 @ (w5 @ w4)).astype(compute_dtype)      # (C_in, latent)

    # Free reshape (no transpose): channels on sublanes, 3N on lanes.
    x3 = x_bc3n.reshape(B, C_in, M3).astype(compute_dtype)

    # Lane-axis tile: full extent if small, else a 128-multiple tile
    # (zero-pad the lane axis; the map is column-wise so padding is exact).
    if M3 <= tn_cap:
        tn, M3p = M3, M3
    else:
        tn = tn_cap                                   # multiple of 128
        M3p = pl.cdiv(M3, tn) * tn
        x3 = jnp.pad(x3, ((0, 0), (0, 0), (0, M3p - M3)))

    grid = (B, M3p // tn)

    z3, xo3 = pl.pallas_call(
        vn_autoencoder_kernel,
        out_shape=(
            jax.ShapeDtypeStruct((B, latent_channels, M3p), jnp.float32),
            jax.ShapeDtypeStruct((B, C_in, M3p), jnp.float32),
        ),
        grid_spec=pltpu.PrefetchScalarGridSpec(
            num_scalar_prefetch=0,
            grid=grid,
            in_specs=[
                pl.BlockSpec((latent_channels, C_in), lambda b, j: (0, 0)),   # We
                pl.BlockSpec((C_in, latent_channels), lambda b, j: (0, 0)),   # Wd
                pl.BlockSpec((None, C_in, tn), lambda b, j: (b, 0, j)),       # x
            ],
            out_specs=[
                pl.BlockSpec((None, latent_channels, tn), lambda b, j: (b, 0, j)),  # z
                pl.BlockSpec((None, C_in, tn), lambda b, j: (b, 0, j)),             # xo
            ],
        ),
        compiler_params=pltpu.CompilerParams(
            dimension_semantics=("parallel", "parallel")),
    )(We, Wd, x3)

    z = z3[:, :, :M3].reshape(B, latent_channels, 3, N)
    x_out = xo3[:, :, :M3].reshape(B, C_in, 3, N)
    return x_out, z


# ----------------------------- parameter init ------------------------------

def init_linear_weight(key, out_ch, in_ch):
    # PyTorch nn.Linear default init: U(-1/sqrt(in), 1/sqrt(in)), shape (out, in)
    k = 1.0 / np.sqrt(in_ch)
    return jax.random.uniform(key, (out_ch, in_ch), jnp.float32, -k, k)


def init_vn_autoencoder_params(key, in_channels, latent_channels):
    dims = [
        (256, in_channels),        # encoder.layer1
        (128, 256),                # encoder.layer2
        (latent_channels, 128),    # encoder.layer3
        (128, latent_channels),    # decoder.layer1
        (256, 128),                # decoder.layer2
        (in_channels, 256),        # decoder.layer3
    ]
    keys = jax.random.split(key, len(dims))
    return [init_linear_weight(k, o, i) for k, (o, i) in zip(keys, dims)]


# ----------------------------- pure-JAX reference ---------------------------

def vn_linear_ref(x, w):
    # x: [B, C_in, 3, N], w: [C_out, C_in]
    return jnp.einsum("oi,bidn->bodn", w, x)


def vn_autoencoder_ref(x, weights):
    h = x
    for w in weights[:3]:
        h = vn_linear_ref(h, w)
    z = h
    for w in weights[3:]:
        h = vn_linear_ref(h, w)
    return h, z


# --------------------------------- main -------------------------------------

if __name__ == "__main__":
    B, in_channels, N = 2, 8, 16
    latent_channels = 64

    key = jax.random.PRNGKey(0)
    k_x, k_w = jax.random.split(key)
    x = jax.random.normal(k_x, (B, in_channels, 3, N), jnp.float32)
    weights = init_vn_autoencoder_params(k_w, in_channels, latent_channels)

    x_out, z = vn_autoencoder_pallas(x, weights, latent_channels)
    x_out, z = jax.block_until_ready((x_out, z))

    # Compare bf16-operand / f32-accumulate kernel against the full 6-layer
    # f32 reference (also validates the offline weight folding).
    x_out_ref, z_ref = vn_autoencoder_ref(x, weights)
    np.testing.assert_allclose(np.asarray(z), np.asarray(z_ref),
                               rtol=2e-2, atol=2e-2)
    np.testing.assert_allclose(np.asarray(x_out), np.asarray(x_out_ref),
                               rtol=2e-2, atol=2e-2)

    print("KERNEL_OK")
</pallas_src>

<mosaic_0001>
module attributes {stable_mosaic.version = 11 : i64} {
  func.func @vn_autoencoder_kernel(%arg0: i32, %arg1: i32, %arg2: memref<64x8xbf16, #tpu.memory_space<vmem>>, %arg3: memref<8x64xbf16, #tpu.memory_space<vmem>>, %arg4: memref<1x8x48xbf16, #tpu.memory_space<vmem>>, %arg5: memref<1x64x48xf32, #tpu.memory_space<vmem>>, %arg6: memref<1x8x48xf32, #tpu.memory_space<vmem>>) attributes {dimension_semantics = [#tpu.dimension_semantics<parallel>, #tpu.dimension_semantics<parallel>], iteration_bounds = array<i64: 2, 1>, scalar_prefetch = 0 : i64, scratch_operands = 0 : i64, tpu.core_type = #tpu.core_type<tc>, window_params = [{pipeline_mode = #tpu.pipeline_mode<synchronous>, transform_indices = @transform_0, window_bounds = array<i64: 64, 8>}, {pipeline_mode = #tpu.pipeline_mode<synchronous>, transform_indices = @transform_1, window_bounds = array<i64: 8, 64>}, {transform_indices = @transform_2, window_bounds = array<i64: 1, 8, 48>}, {transform_indices = @transform_3, window_bounds = array<i64: 1, 64, 48>}, {transform_indices = @transform_4, window_bounds = array<i64: 1, 8, 48>}]} {
    %c0 = arith.constant 0 : index
    %c0_0 = arith.constant 0 : index
    %c0_1 = arith.constant 0 : index
    %0 = vector.load %arg4[%c0, %c0_0, %c0_1] : memref<1x8x48xbf16, #tpu.memory_space<vmem>>, vector<1x8x48xbf16>
    %1 = vector.shape_cast %0 : vector<1x8x48xbf16> to vector<8x48xbf16>
    %c0_2 = arith.constant 0 : index
    %c0_3 = arith.constant 0 : index
    %2 = vector.load %arg2[%c0_2, %c0_3] : memref<64x8xbf16, #tpu.memory_space<vmem>>, vector<64x8xbf16>
    %cst = arith.constant dense<0.000000e+00> : vector<64x48xf32>
    %3 = tpu.matmul %2, %1, %cst {dimension_numbers = #tpu.dot_dimension_numbers<[1], [0], [0], [1], [0, 0, 1, 1], [], []>} : vector<64x8xbf16>, vector<8x48xbf16>, vector<64x48xf32> -> vector<64x48xf32>
    %c0_4 = arith.constant 0 : index
    %c0_5 = arith.constant 0 : index
    %4 = vector.load %arg3[%c0_4, %c0_5] : memref<8x64xbf16, #tpu.memory_space<vmem>>, vector<8x64xbf16>
    %5 = arith.truncf %3 : vector<64x48xf32> to vector<64x48xbf16>
    %cst_6 = arith.constant dense<0.000000e+00> : vector<8x48xf32>
    %6 = tpu.matmul %4, %5, %cst_6 {dimension_numbers = #tpu.dot_dimension_numbers<[1], [0], [0], [1], [0, 0, 1, 1], [], []>} : vector<8x64xbf16>, vector<64x48xbf16>, vector<8x48xf32> -> vector<8x48xf32>
    %c0_7 = arith.constant 0 : index
    %c0_8 = arith.constant 0 : index
    %c0_9 = arith.constant 0 : index
    %7 = vector.load %arg5[%c0_7, %c0_8, %c0_9] : memref<1x64x48xf32, #tpu.memory_space<vmem>>, vector<1x64x48xf32>
    %8 = vector.shape_cast %7 : vector<1x64x48xf32> to vector<64x48xf32>
    %9 = vector.shape_cast %3 : vector<64x48xf32> to vector<1x64x48xf32>
    tpu.vector_store %arg5[%c0_7, %c0_8, %c0_9], %9 {strides = array<i32>} : memref<1x64x48xf32, #tpu.memory_space<vmem>>, vector<1x64x48xf32>,
    %c0_10 = arith.constant 0 : index
    %c0_11 = arith.constant 0 : index
    %c0_12 = arith.constant 0 : index
    %10 = vector.load %arg6[%c0_10, %c0_11, %c0_12] : memref<1x8x48xf32, #tpu.memory_space<vmem>>, vector<1x8x48xf32>
    %11 = vector.shape_cast %10 : vector<1x8x48xf32> to vector<8x48xf32>
    %12 = vector.shape_cast %6 : vector<8x48xf32> to vector<1x8x48xf32>
    tpu.vector_store %arg6[%c0_10, %c0_11, %c0_12], %12 {strides = array<i32>} : memref<1x8x48xf32, #tpu.memory_space<vmem>>, vector<1x8x48xf32>,
    return
  }
  func.func @transform_0(%arg0: i32, %arg1: i32) -> (i32, i32) {
    %c0_i32 = arith.constant 0 : i32
    %c0_i32_0 = arith.constant 0 : i32
    %c0_i32_1 = arith.constant 0 : i32
    return %c0_i32, %c0_i32_0 : i32, i32
  }
  func.func @transform_1(%arg0: i32, %arg1: i32) -> (i32, i32) {
    %c0_i32 = arith.constant 0 : i32
    %c0_i32_0 = arith.constant 0 : i32
    %c0_i32_1 = arith.constant 0 : i32
    return %c0_i32, %c0_i32_0 : i32, i32
  }
  func.func @transform_2(%arg0: i32, %arg1: i32) -> (i32, i32, i32) {
    %c0_i32 = arith.constant 0 : i32
    %c0_i32_0 = arith.constant 0 : i32
    return %arg0, %c0_i32, %arg1 : i32, i32, i32
  }
  func.func @transform_3(%arg0: i32, %arg1: i32) -> (i32, i32, i32) {
    %c0_i32 = arith.constant 0 : i32
    %c0_i32_0 = arith.constant 0 : i32
    return %arg0, %c0_i32, %arg1 : i32, i32, i32
  }
  func.func @transform_4(%arg0: i32, %arg1: i32) -> (i32, i32, i32) {
    %c0_i32 = arith.constant 0 : i32
    %c0_i32_0 = arith.constant 0 : i32
    return %arg0, %c0_i32, %arg1 : i32, i32, i32
  }
}

</mosaic_0001>

<llo_original>
// kernel: tpu_custom_call.1
$region0: #{tpu_custom_call.1}
  #allocation0 [shape = 'u32[]', space=smem, size = 0x4, offset = 0x4, fixed_abs, tag = 'smem constant byte address 0x4 - core index']
  #allocation1 [shape = 'u32[144,128]{1,0:T(1,128)}', space=vmem, size = 0x12000, scoped, tag = 'internal scratch']
  %s0 = inlined_call_operand.vmem [shape: bf16[64,8], index: 0, kind: input, shape index: {}]
  %s1 = inlined_call_operand.vmem [shape: bf16[8,64], index: 1, kind: input, shape index: {}]
  %s2 = inlined_call_operand.vmem [shape: bf16[2,8,48], index: 2, kind: input, shape index: {}]
  %s3 = inlined_call_operand.vmem [shape: f32[2,64,48], index: 3, kind: output, shape index: {0}]
  %s4 = inlined_call_operand.hbm [shape: f32[2,8,48], index: 4, kind: output, shape index: {1}]
  %5 = xla_tuple %s3, %s4
  %s6 = sld [smem:[#allocation0]]
  $region53: #{tpu_custom_call.1} parent=0
    _
  %s8 = ssub.s32 1, %s6
  %s9 = scalar_select 0, %s8, %s6
  $region1: #{tpu_custom_call.1} parent=0
    #allocation2 [shape = 'u8[8192]{0}', space=vmem, size = 0x2000, scoped, tag = 'output window, operand 1']
    #allocation3 [shape = 's32[2]{0}', space=sflag, size = 0x8, scoped, tag = 'scoped memory for tpu_custom_call.1']
    %10 = vsyncpa [#allocation3], 0
    %s11 = scalar_lea.sflag [#allocation3], 1
    %12 = vsyncpa %s11, 0
    loop: start=0, step=1, limit=4
    $region2: #{tpu_custom_call.1} parent=1 // loop_pre_header
      _
    $region3: #{tpu_custom_call.1} parent=1 // loop_header
      %s14 = sphi 0, %s18
      %p15 = scmp.ge.s32.totalorder %s14, 4
      %s21 = sphi 0, %s33
      %s22 = sphi 0, %s29
      %s23 = sphi 0, %s21
      %s24 = sphi 0, %s22
      %s25 = sphi 0, %s23
      %s26 = sphi 0, %s24
      %s34 = sphi 0, %s34
      %s36 = sphi 0, %s34
      %s37 = sphi 0, %s36
      %s51 = sphi 0, %s37
      %s55 = sphi 0, %s55
      %s57 = sphi 0, %s55
      %s58 = sphi 0, %s57
      %s72 = sphi 0, %s58
      %s80 = sphi 0, %s82
      %s83 = sphi 0, %s80
      %s84 = sphi 0, %s83
      %s100 = sphi 0, %s84
      %s108 = sphi 0, %s110
      %s111 = sphi 0, %s108
      %s112 = sphi 0, %s111
      %s128 = sphi 0, %s112
      %s136 = sphi 0, %s138
      %s139 = sphi 0, %s136
      %s140 = sphi 0, %s139
      %s156 = sphi 0, %s140
    $region4: #{tpu_custom_call.1} parent=1 // loop_header_branch
      %17 = sbr.rel (%p15) target = $region8
    $region5: #{tpu_custom_call.1} parent=1 // loop_body
      %s19 = ssub.s32 %s14, 1
      %s20 = ssub.s32 %s14, 2
      %s27 = sadd.s32 1, %s22
      %p28 = scmp.ge.s32.totalorder %s27, 1
      %s29 = scalar_select %p28, 0, %s27
      %s30 = sadd.s32 1, %s21
      %s31 = scalar_select %p28, %s30, %s21
      %p32 = scmp.ge.s32.totalorder %s31, 2
      %s33 = scalar_select %p32, 0, %s31
      %s35 = sadd.s32 %s34, 1
      %p38 = scmp.eq.s32.totalorder %s14, 1
      %p39 = scmp.ne.s32.totalorder %s34, %s36
      %p40 = scmp.eq.s32.totalorder %s14, 0
      %p41 = por %p39, %p40
      %p42 = scmp.ne.s32.totalorder %s34, %s36
      %p43 = scmp.eq.s32.totalorder %s19, 1
      %p44 = por %p42, %p43
      %p45 = scmp.ne.s32.totalorder %s36, %s37
      %p46 = scmp.eq.s32.totalorder %s19, 0
      %p47 = por %p45, %p46
      %p48 = scmp.ne.s32.totalorder %s36, %s37
      %p49 = scmp.eq.s32.totalorder %s20, 1
      %p50 = por %p48, %p49
      %p52 = scmp.ne.s32.totalorder %s37, %s51
      %p53 = scmp.eq.s32.totalorder %s20, 0
      %p54 = por %p52, %p53
      %s56 = sadd.s32 %s55, 1
      %p59 = scmp.eq.s32.totalorder %s14, 1
      %p60 = scmp.ne.s32.totalorder %s55, %s57
      %p61 = scmp.eq.s32.totalorder %s14, 0
      %p62 = por %p60, %p61
      %p63 = scmp.ne.s32.totalorder %s55, %s57
      %p64 = scmp.eq.s32.totalorder %s19, 1
      %p65 = por %p63, %p64
      %p66 = scmp.ne.s32.totalorder %s57, %s58
      %p67 = scmp.eq.s32.totalorder %s19, 0
      %p68 = por %p66, %p67
      %p69 = scmp.ne.s32.totalorder %s57, %s58
      %p70 = scmp.eq.s32.totalorder %s20, 1
      %p71 = por %p69, %p70
      %p73 = scmp.ne.s32.totalorder %s58, %s72
      %p74 = scmp.eq.s32.totalorder %s20, 0
      %p75 = por %p73, %p74
      %s76 = ssub.s32 %s21, %s33
      %s77 = ssub.s32 %s22, %s29
      %s78 = sor.u32 %s76, %s77
      %p79 = scmp.eq.s32.totalorder %s78, 0
      %s81 = sadd.s32 %s80, 1
      %s82 = scalar_select %p79, %s80, %s81
      %p85 = pneg %p79
      %p86 = scmp.eq.s32.totalorder %s14, 1
      %p87 = por %p85, %p86
      %p88 = scmp.ne.s32.totalorder %s80, %s83
      %p89 = scmp.eq.s32.totalorder %s14, 0
      %p90 = por %p88, %p89
      %p91 = scmp.ne.s32.totalorder %s80, %s83
      %p92 = scmp.eq.s32.totalorder %s19, 1
      %p93 = por %p91, %p92
      %p94 = scmp.ne.s32.totalorder %s83, %s84
      %p95 = scmp.eq.s32.totalorder %s19, 0
      %p96 = por %p94, %p95
      %p97 = scmp.ne.s32.totalorder %s83, %s84
      %p98 = scmp.eq.s32.totalorder %s20, 1
      %p99 = por %p97, %p98
      %p101 = scmp.ne.s32.totalorder %s84, %s100
      %p102 = scmp.eq.s32.totalorder %s20, 0
      %p103 = por %p101, %p102
      %s104 = ssub.s32 %s21, %s33
      %s105 = ssub.s32 %s22, %s29
      %s106 = sor.u32 %s104, %s105
      %p107 = scmp.eq.s32.totalorder %s106, 0
      %s109 = sadd.s32 %s108, 1
      %s110 = scalar_select %p107, %s108, %s109
      %p113 = pneg %p107
      %p114 = scmp.eq.s32.totalorder %s14, 1
      %p115 = por %p113, %p114
      %p116 = scmp.ne.s32.totalorder %s108, %s111
      %p117 = scmp.eq.s32.totalorder %s14, 0
      %p118 = por %p116, %p117
      %p119 = scmp.ne.s32.totalorder %s108, %s111
      %p120 = scmp.eq.s32.totalorder %s19, 1
      %p121 = por %p119, %p120
      %p122 = scmp.ne.s32.totalorder %s111, %s112
      %p123 = scmp.eq.s32.totalorder %s19, 0
      %p124 = por %p122, %p123
      %p125 = scmp.ne.s32.totalorder %s111, %s112
      %p126 = scmp.eq.s32.totalorder %s20, 1
      %p127 = por %p125, %p126
      %p129 = scmp.ne.s32.totalorder %s112, %s128
      %p130 = scmp.eq.s32.totalorder %s20, 0
      %p131 = por %p129, %p130
      %s132 = ssub.s32 %s21, %s33
      %s133 = ssub.s32 %s22, %s29
      %s134 = sor.u32 %s132, %s133
      %p135 = scmp.eq.s32.totalorder %s134, 0
      %s137 = sadd.s32 %s136, 1
      %s138 = scalar_select %p135, %s136, %s137
      %p141 = pneg %p135
      %p142 = scmp.eq.s32.totalorder %s14, 1
      %p143 = por %p141, %p142
      %p144 = scmp.ne.s32.totalorder %s136, %s139
      %p145 = scmp.eq.s32.totalorder %s14, 0
      %p146 = por %p144, %p145
      %p147 = scmp.ne.s32.totalorder %s136, %s139
      %p148 = scmp.eq.s32.totalorder %s19, 1
      %p149 = por %p147, %p148
      %p150 = scmp.ne.s32.totalorder %s139, %s140
      %p151 = scmp.eq.s32.totalorder %s19, 0
      %p152 = por %p150, %p151
      %p153 = scmp.ne.s32.totalorder %s139, %s140
      %p154 = scmp.eq.s32.totalorder %s20, 1
      %p155 = por %p153, %p154
      %p157 = scmp.ne.s32.totalorder %s140, %s156
      %p158 = scmp.eq.s32.totalorder %s20, 0
      %p159 = por %p157, %p158
      %p160 = scmp.le.s32.totalorder 1, %s14
      %p161 = scmp.lt.s32.totalorder %s14, 3
      %p162 = pnand %p160, %p161
      %p163 = pneg %p162
      // Predicated region
      $region9: #{tpu_custom_call.1} parent=5 // pred_check
        _
      $region10: #{tpu_custom_call.1} parent=5 // pred_check_branch
        %165 = sbr.rel (%p162) target = $region12
      $region11: #{tpu_custom_call.1} parent=5 // pred_region
        %s166 = ssub.s32 %s14, 1
        // Predicated region
        $region13: #{tpu_custom_call.1} parent=11 // pred_check
          %p167 = pneg %p47
        $region14: #{tpu_custom_call.1} parent=11 // pred_check_branch
          %169 = sbr.rel (%p167) target = $region16
        $region15: #{tpu_custom_call.1} parent=11 // pred_region
          _
        $region16: #{tpu_custom_call.1} parent=11 // pred_fallthru
          _
        // Predicated region
        $region17: #{tpu_custom_call.1} parent=11 // pred_check
          %p170 = pneg %p68
        $region18: #{tpu_custom_call.1} parent=11 // pred_check_branch
          %172 = sbr.rel (%p170) target = $region20
        $region19: #{tpu_custom_call.1} parent=11 // pred_region
          _
        $region20: #{tpu_custom_call.1} parent=11 // pred_fallthru
          _
      $region12: #{tpu_custom_call.1} parent=5 // pred_fallthru
        _
      %p173 = scmp.lt.s32.totalorder %s14, 2
      // Predicated region
      $region21: #{tpu_custom_call.1} parent=5 // pred_check
        %p174 = pneg %p173
      $region22: #{tpu_custom_call.1} parent=5 // pred_check_branch
        %176 = sbr.rel (%p174) target = $region24
      $region23: #{tpu_custom_call.1} parent=5 // pred_region
        // Predicated region
        $region25: #{tpu_custom_call.1} parent=23 // pred_check
          %p177 = pneg %p90
        $region26: #{tpu_custom_call.1} parent=23 // pred_check_branch
          %179 = sbr.rel (%p177) target = $region28
        $region27: #{tpu_custom_call.1} parent=23 // pred_region
          %p180 = scmp.lt.s32.totalorder %s21, 1
          %s181 = scalar_select %p180, %s21, 1
          %p182 = scmp.lt.s32.totalorder %s22, 0
          %s183 = scalar_select %p182, %s22, 0
          %s184 = sadd.s32 %s183, %s181
          %s185 = smul.addr %s184, 4
          %s186 = scalar_lea.vmem %s2, %s185
        $region28: #{tpu_custom_call.1} parent=23 // pred_fallthru
          _
      $region24: #{tpu_custom_call.1} parent=5 // pred_fallthru
        _
      %p187 = scmp.le.s32.totalorder 1, %s14
      %p188 = scmp.lt.s32.totalorder %s14, 3
      %p189 = pnand %p187, %p188
      %p190 = pneg %p189
      // Predicated region
      $region29: #{tpu_custom_call.1} parent=5 // pred_check
        _
      $region30: #{tpu_custom_call.1} parent=5 // pred_check_branch
        %192 = sbr.rel (%p189) target = $region32
      $region31: #{tpu_custom_call.1} parent=5 // pred_region
        %s193 = ssub.s32 %s14, 1
        %p194 = pneg %p47
        %p195 = pneg %p44
        %p196 = pneg %p68
        %p197 = pneg %p65
        %p198 = scmp.lt.s32.totalorder %s23, 1
        %s199 = scalar_select %p198, %s23, 1
        %p200 = scmp.lt.s32.totalorder %s24, 0
        %s201 = scalar_select %p200, %s24, 0
        %s202 = sadd.s32 %s201, %s199
        %s203 = smul.addr %s202, 4
        %s204 = scalar_lea.vmem %s2, %s203
        %p205 = pneg %p96
        %p206 = pneg %p93
        %p207 = pneg %p124
        %p208 = pneg %p121
        %p209 = scmp.lt.s32.totalorder %s23, 1
        %s210 = scalar_select %p209, %s23, 1
        %p211 = scmp.lt.s32.totalorder %s24, 0
        %s212 = scalar_select %p211, %s24, 0
        %s213 = smul.addr %s210, 8
        %s214 = sadd.s32 %s212, %s213
        %s215 = smul.addr %s214, 8
        %s216 = scalar_lea.vmem %s3, %s215
        %p217 = pneg %p152
        %p218 = pneg %p149
        %s219 = sand.u32 %s139, 1
        %s220 = scalar_lea.sflag [#allocation3], %s219
        %s221 = sand.u32 %s139, 1
        %s222 = smul.addr %s221, 8
        %s223 = scalar_lea.vmem [#allocation2], %s222
        %p224 = scmp.lt.s32.totalorder %s23, 1
        %s225 = scalar_select %p224, %s23, 1
        %p226 = scmp.lt.s32.totalorder %s24, 0
        %s227 = scalar_select %p226, %s24, 0
        %s228 = sadd.s32 %s227, %s225
        %s229 = smul.addr %s228, 4
        %s230 = scalar_lea.vmem %s2, %s229
        %p231 = scmp.lt.s32.totalorder %s23, 1
        %s232 = scalar_select %p231, %s23, 1
        %p233 = scmp.lt.s32.totalorder %s24, 0
        %s234 = scalar_select %p233, %s24, 0
        %s235 = smul.addr %s232, 8
        %s236 = sadd.s32 %s234, %s235
        %s237 = smul.addr %s236, 8
        %s238 = scalar_lea.vmem %s3, %s237
        %v240 = vld [vmem:[%s230] sm:$0xf]
        %v241 = vld [vmem:[%s0] sm:$0xf]
        %v242 = vld [vmem:[%s0 + $0x4] sm:$0xf]
        %v243 = vld [vmem:[%s0 + $0x8] sm:$0xf]
        %v244 = vld [vmem:[%s0 + $0xc] sm:$0xf]
        %v245 = vld [vmem:[%s0 + $0x10] sm:$0xf]
        %v246 = vld [vmem:[%s0 + $0x14] sm:$0xf]
        %v247 = vld [vmem:[%s0 + $0x18] sm:$0xf]
        %v248 = vld [vmem:[%s0 + $0x1c] sm:$0xf]
        %v257 = vunpack.c.l.b16 %v241
        %v258 = vunpack.c.l.b16 %v242
        %v259 = vunpack.c.l.b16 %v243
        %v260 = vunpack.c.l.b16 %v244
        %v261 = vunpack.c.l.b16 %v245
        %v262 = vunpack.c.l.b16 %v246
        %v263 = vunpack.c.l.b16 %v247
        %v264 = vunpack.c.l.b16 %v248
        %v265 = vpack.c.b16 %v258, %v257
        %v266 = vpack.c.b16 %v260, %v259
        %v267 = vpack.c.b16 %v262, %v261
        %v268 = vpack.c.b16 %v264, %v263
        %vm269 = vcmask 64512
        %v271 = vsel %vm269, %v265, 0
        %v274 = vsel %vm269, %v266, 0
        %v277 = vsel %vm269, %v267, 0
        %v280 = vsel %vm269, %v268, 0
        %vm282 = vcmask 1043456
        %v284 = vsel %vm282, %v240, 0
        %286 = vmatprep.subr.bf16.mxu0 0
        %287 = vmatpush1.bf16.msra.mxu0 0
        %288 = vmatprep.subr.bf16.mxu0 0
        %289 = vmatpush1.bf16.msra.mxu0 0
        %290 = vmatprep.subr.bf16.mxu0 0
        %291 = vmatpush1.bf16.msra.mxu0 0
        %292 = vmatprep.subr.bf16.mxu0 0
        %293 = vmatpush1.bf16.msra.mxu0 0
        %294 = vmatprep.subr.bf16.mxu0 0
        %295 = vmatpush1.bf16.msra.mxu0 0
        %296 = vmatprep.subr.bf16.mxu0 0
        %297 = vmatpush1.bf16.msra.mxu0 0
        %298 = vmatprep.subr.bf16.mxu0 0
        %299 = vmatpush1.bf16.msra.mxu0 0
        %300 = vmatprep.subr.bf16.mxu0 0
        %301 = vmatpush1.bf16.msra.mxu0 %v284
        %302 = vmatprep.subr.bf16.mxu0 0
        %303 = vmatpush2.bf16.msra.mxu0 0
        %304 = vmatprep.subr.bf16.mxu0 0
        %305 = vmatpush2.bf16.msra.mxu0 0
        %306 = vmatprep.subr.bf16.mxu0 0
        %307 = vmatpush2.bf16.msra.mxu0 0
        %308 = vmatprep.subr.bf16.mxu0 0
        %309 = vmatpush2.bf16.msra.mxu0 0
        %310 = vmatprep.subr.bf16.mxu0 0
        %311 = vmatpush2.bf16.msra.mxu0 0
        %312 = vmatprep.subr.bf16.mxu0 0
        %313 = vmatpush2.bf16.msra.mxu0 0
        %314 = vmatprep.subr.bf16.mxu0 0
        %315 = vmatpush2.bf16.msra.mxu0 0
        %316 = vmatprep.subr.bf16.mxu0 0
        %317 = vmatpush2.bf16.msra.mxu0 0
        %318 = vmatprep.mubr.bf16.mxu0 0
        %319 = vmatmul.mubr.bf16.gmra.mxu0 %v271
        %v320 = vpop.f32.mrf.mxu0
        %v321 = vadd.f32 0.0, %v320
        %v322 = vpop.f32.mrf.mxu0
        %v323 = vpop.f32.mrf.mxu0
        %v324 = vadd.f32 0.0, %v323
        %v325 = vpop.f32.mrf.mxu0
        %326 = vmatprep.mubr.bf16.mxu0 0
        %327 = vmatmul.mubr.bf16.gmra.mxu0 %v274
        %v328 = vpop.f32.mrf.mxu0
        %v329 = vadd.f32 0.0, %v328
        %v330 = vpop.f32.mrf.mxu0
        %v331 = vpop.f32.mrf.mxu0
        %v332 = vadd.f32 0.0, %v331
        %v333 = vpop.f32.mrf.mxu0
        %334 = vmatprep.mubr.bf16.mxu0 0
        %335 = vmatmul.mubr.bf16.gmra.mxu0 %v277
        %v336 = vpop.f32.mrf.mxu0
        %v337 = vadd.f32 0.0, %v336
        %v338 = vpop.f32.mrf.mxu0
        %v339 = vpop.f32.mrf.mxu0
        %v340 = vadd.f32 0.0, %v339
        %v341 = vpop.f32.mrf.mxu0
        %342 = vmatprep.mubr.bf16.mxu0 0
        %343 = vmatmul.mubr.bf16.gmra.mxu0 %v280
        %v344 = vpop.f32.mrf.mxu0
        %v345 = vadd.f32 0.0, %v344
        %v346 = vpop.f32.mrf.mxu0
        %v347 = vpop.f32.mrf.mxu0
        %v348 = vadd.f32 0.0, %v347
        %v349 = vpop.f32.mrf.mxu0
        %350 = vdwg.mxu0
        %v351 = vld [vmem:[%s1] sm:$0xf]
        %v352 = vpack.c.bf16 %v324, %v321
        %v353 = vpack.c.bf16 %v332, %v329
        %v354 = vpack.c.bf16 %v340, %v337
        %v355 = vpack.c.bf16 %v348, %v345
        %vm356 = vcmask 523264
        %v358 = vsel %vm356, %v351, 0
        %360 = vmatprep.subr.bf16.mxu0 0
        %361 = vmatpush1.bf16.msra.mxu0 0
        %362 = vmatprep.subr.bf16.mxu0 0
        %363 = vmatpush1.bf16.msra.mxu0 0
        %364 = vmatprep.subr.bf16.mxu0 0
        %365 = vmatpush1.bf16.msra.mxu0 0
        %366 = vmatprep.subr.bf16.mxu0 0
        %367 = vmatpush1.bf16.msra.mxu0 0
        %368 = vmatprep.subr.bf16.mxu0 0
        %369 = vmatpush1.bf16.msra.mxu0 %v355
        %370 = vmatprep.subr.bf16.mxu0 0
        %371 = vmatpush1.bf16.msra.mxu0 %v354
        %372 = vmatprep.subr.bf16.mxu0 0
        %373 = vmatpush1.bf16.msra.mxu0 %v353
        %374 = vmatprep.subr.bf16.mxu0 0
        %375 = vmatpush1.bf16.msra.mxu0 %v352
        %376 = vmatprep.subr.bf16.mxu0 0
        %377 = vmatpush2.bf16.msra.mxu0 0
        %378 = vmatprep.subr.bf16.mxu0 0
        %379 = vmatpush2.bf16.msra.mxu0 0
        %380 = vmatprep.subr.bf16.mxu0 0
        %381 = vmatpush2.bf16.msra.mxu0 0
        %382 = vmatprep.subr.bf16.mxu0 0
        %383 = vmatpush2.bf16.msra.mxu0 0
        %384 = vmatprep.subr.bf16.mxu0 0
        %385 = vmatpush2.bf16.msra.mxu0 0
        %386 = vmatprep.subr.bf16.mxu0 0
        %387 = vmatpush2.bf16.msra.mxu0 0
        %388 = vmatprep.subr.bf16.mxu0 0
        %389 = vmatpush2.bf16.msra.mxu0 0
        %390 = vmatprep.subr.bf16.mxu0 0
        %391 = vmatpush2.bf16.msra.mxu0 0
        %392 = vmatprep.mubr.bf16.mxu0 0
        %393 = vmatmul.mubr.bf16.gmra.mxu0 %v358
        %v394 = vpop.f32.mrf.mxu0
        %v395 = vadd.f32 0.0, %v394
        %v396 = vpop.f32.mrf.mxu0
        %v397 = vpop.f32.mrf.mxu0
        %v398 = vpop.f32.mrf.mxu0
        %399 = vdwg.mxu0
        %vm400 = vcmask 392192
        %401 = vst.msk [vmem:[%s238] sm:$0xff] %vm400, %v321
        %402 = vst.msk [vmem:[%s238 + $0x8] sm:$0xff] %vm400, %v324
        %403 = vst.msk [vmem:[%s238 + $0x10] sm:$0xff] %vm400, %v329
        %404 = vst.msk [vmem:[%s238 + $0x18] sm:$0xff] %vm400, %v332
        %405 = vst.msk [vmem:[%s238 + $0x20] sm:$0xff] %vm400, %v337
        %406 = vst.msk [vmem:[%s238 + $0x28] sm:$0xff] %vm400, %v340
        %407 = vst.msk [vmem:[%s238 + $0x30] sm:$0xff] %vm400, %v345
        %408 = vst.msk [vmem:[%s238 + $0x38] sm:$0xff] %vm400, %v348
        %409 = vst.msk [vmem:[%s223] sm:$0xff] %vm400, %v395
        %p410 = scmp.lt.s32.totalorder %s23, 1
        %s411 = scalar_select %p410, %s23, 1
        %p412 = scmp.lt.s32.totalorder %s24, 0
        %s413 = scalar_select %p412, %s24, 0
        %s414 = smul.addr %s411, 8
        %s415 = sadd.s32 %s413, %s414
        %s416 = smul.addr %s415, 8
        %s417 = scalar_lea.vmem %s3, %s416
        %s418 = sand.u32 %s139, 1
        %s419 = scalar_lea.sflag [#allocation3], %s418
        %s420 = sand.u32 %s139, 1
        %s421 = smul.addr %s420, 8
        %s422 = scalar_lea.vmem [#allocation2], %s421
        // Predicated region
        $region33: #{tpu_custom_call.1} parent=31 // pred_check
          %p423 = pneg %p121
        $region34: #{tpu_custom_call.1} parent=31 // pred_check_branch
          %425 = sbr.rel (%p423) target = $region36
        $region35: #{tpu_custom_call.1} parent=31 // pred_region
          _
        $region36: #{tpu_custom_call.1} parent=31 // pred_fallthru
          _
        // Predicated region
        $region37: #{tpu_custom_call.1} parent=31 // pred_check
          %p426 = pneg %p149
        $region38: #{tpu_custom_call.1} parent=31 // pred_check_branch
          %428 = sbr.rel (%p426) target = $region40
        $region39: #{tpu_custom_call.1} parent=31 // pred_region
          %s430 = ssub.s32 128, 128
          %431 = vsyncadd %s419, %s430
          %s432 = sadd.s32 %s24, %s23
          %s433 = smul.addr %s432, 128
          %s434 = scalar_lea.hbm %s4, %s433
          %s436 = sshll.u32 %s422, 4
          %s437 = int_to_ptr.vmem [resolvable:$true] %s436
          %439 = dma.vmem_to_hbm [thread:$0]  %s437, 128, %s434, %s419
        $region40: #{tpu_custom_call.1} parent=31 // pred_fallthru
          _
      $region32: #{tpu_custom_call.1} parent=5 // pred_fallthru
        _
      %p440 = scmp.le.s32.totalorder 2, %s14
      // Predicated region
      $region41: #{tpu_custom_call.1} parent=5 // pred_check
        %p441 = pneg %p440
      $region42: #{tpu_custom_call.1} parent=5 // pred_check_branch
        %443 = sbr.rel (%p441) target = $region44
      $region43: #{tpu_custom_call.1} parent=5 // pred_region
        %s444 = ssub.s32 %s14, 2
        // Predicated region
        $region45: #{tpu_custom_call.1} parent=43 // pred_check
          %p445 = pneg %p127
        $region46: #{tpu_custom_call.1} parent=43 // pred_check_branch
          %447 = sbr.rel (%p445) target = $region48
        $region47: #{tpu_custom_call.1} parent=43 // pred_region
          %p448 = scmp.lt.s32.totalorder %s25, 1
          %s449 = scalar_select %p448, %s25, 1
          %p450 = scmp.lt.s32.totalorder %s26, 0
          %s451 = scalar_select %p450, %s26, 0
          %s452 = smul.addr %s449, 8
          %s453 = sadd.s32 %s451, %s452
          %s454 = smul.addr %s453, 8
          %s455 = scalar_lea.vmem %s3, %s454
        $region48: #{tpu_custom_call.1} parent=43 // pred_fallthru
          _
        // Predicated region
        $region49: #{tpu_custom_call.1} parent=43 // pred_check
          %p456 = pneg %p155
        $region50: #{tpu_custom_call.1} parent=43 // pred_check_branch
          %458 = sbr.rel (%p456) target = $region52
        $region51: #{tpu_custom_call.1} parent=43 // pred_region
          %s459 = sand.u32 %s140, 1
          %s460 = scalar_lea.sflag [#allocation3], %s459
          %s461 = sand.u32 %s140, 1
          %s462 = smul.addr %s461, 8
          %s463 = scalar_lea.vmem [#allocation2], %s462
          %464 = dma.done %s460, 128
        $region52: #{tpu_custom_call.1} parent=43 // pred_fallthru
          _
      $region44: #{tpu_custom_call.1} parent=5 // pred_fallthru
        _
    $region6: #{tpu_custom_call.1} parent=1 // loop_footer
      %s18 = sadd.s32 1, %s14
    $region7: #{tpu_custom_call.1} parent=1 // loop_footer_branch
      %13 = sbr.rel target = $region3
    $region8: #{tpu_custom_call.1} parent=1 // loop_exit
      _
    %465 = vsyncpa [#allocation3], 1
    %s466 = scalar_lea.sflag [#allocation3], 1
    %467 = vsyncpa %s466, 1

</llo_original>
